<compile_context>
chip_gen: v5e
topology: v5e:2x2
jax: 0.10.0
libtpu: 0.0.40
codegen_flags: <defaults>
</compile_context>

<pallas_src>
import functools

import jax
import jax.numpy as jnp
from jax import lax
from jax.experimental import pallas as pl
from jax.experimental.pallas import tpu as pltpu


def _round_up(v: int, m: int) -> int:
    return ((v + m - 1) // m) * m


def _accumulate(x_ref, w_ref, acc_ref, compute_dtype):
    # x_ref: (tm, tk), w_ref: (tn, tk)  ->  acc += x @ w.T   (contract last dims)
    a = x_ref[...]
    b = w_ref[...]
    if compute_dtype is not None:
        a = a.astype(compute_dtype)
        b = b.astype(compute_dtype)
    acc_ref[...] += lax.dot_general(
        a, b,
        dimension_numbers=(((1,), (1,)), ((), ())),
        preferred_element_type=jnp.float32,
    )


def _linear_relu_kernel(x_ref, w_ref, o_ref, acc_ref, *, compute_dtype=None):
    k = pl.program_id(2)

    @pl.when(k == 0)
    def _():
        acc_ref[...] = jnp.zeros_like(acc_ref)

    _accumulate(x_ref, w_ref, acc_ref, compute_dtype)

    @pl.when(k == pl.num_programs(2) - 1)
    def _():
        o_ref[...] = jnp.maximum(acc_ref[...], 0.0).astype(o_ref.dtype)


def _linear_relu_dropout_kernel(x_ref, w_ref, u_ref, o_ref, acc_ref, *,
                                p: float, compute_dtype=None):
    k = pl.program_id(2)

    @pl.when(k == 0)
    def _():
        acc_ref[...] = jnp.zeros_like(acc_ref)

    _accumulate(x_ref, w_ref, acc_ref, compute_dtype)

    @pl.when(k == pl.num_programs(2) - 1)
    def _():
        y = jnp.maximum(acc_ref[...], 0.0)
        keep = u_ref[...] >= p                      # keep prob = 1 - p
        y = jnp.where(keep, y * (1.0 / (1.0 - p)), 0.0)
        o_ref[...] = y.astype(o_ref.dtype)


def linear_block(x, weight, *, p: float = 0.2, training: bool = False,
                 rng_key=None, tm: int = 256, tn: int = 256, tk: int = 512,
                 compute_dtype=None):
    """Forward pass of LinearBlock.

    x:      [batch, input_dim]        float32
    weight: [output_dim, input_dim]   (PyTorch nn.Linear layout, bias=False)
    returns [batch, output_dim]
    """
    batch, input_dim = x.shape
    output_dim, in2 = weight.shape
    assert in2 == input_dim, "weight must be [output_dim, input_dim]"

    if training and p >= 1.0:
        return jnp.zeros((batch, output_dim), dtype=x.dtype)

    # (8,128)-aligned effective tiles, clamped to (padded) problem dims.
    tm_e = min(tm, _round_up(batch, 8))
    tn_e = min(tn, _round_up(output_dim, 128))
    tk_e = min(tk, _round_up(input_dim, 128))
    M = _round_up(batch, tm_e)
    N = _round_up(output_dim, tn_e)
    K = _round_up(input_dim, tk_e)

    x_p = x if (M, K) == (batch, input_dim) else jnp.pad(
        x, ((0, M - batch), (0, K - input_dim)))
    w_p = weight if (N, K) == (output_dim, input_dim) else jnp.pad(
        weight, ((0, N - output_dim), (0, K - input_dim)))

    grid = (M // tm_e, N // tn_e, K // tk_e)
    x_spec = pl.BlockSpec((tm_e, tk_e), lambda i, j, k: (i, k))
    w_spec = pl.BlockSpec((tn_e, tk_e), lambda i, j, k: (j, k))
    u_spec = pl.BlockSpec((tm_e, tn_e), lambda i, j, k: (i, j))
    o_spec = pl.BlockSpec((tm_e, tn_e), lambda i, j, k: (i, j))
    scratch = [pltpu.VMEM((tm_e, tn_e), jnp.float32)]

    apply_dropout = training and p > 0.0
    bytes_accessed = 4 * (M * K + N * K + M * N + (M * N if apply_dropout else 0))
    cost = pl.CostEstimate(flops=2 * M * N * K, transcendentals=0,
                           bytes_accessed=bytes_accessed)
    cparams = pltpu.CompilerParams(
        dimension_semantics=("parallel", "parallel", "arbitrary"),
        vmem_limit_bytes=32 * 1024 * 1024,   # safe on v5e/v6e/v7x; tiles are small
    )

    if apply_dropout:
        if rng_key is None:
            rng_key = jax.random.PRNGKey(0)
        u = jax.random.uniform(rng_key, (M, N), dtype=jnp.float32)
        kernel = functools.partial(_linear_relu_dropout_kernel, p=float(p),
                                   compute_dtype=compute_dtype)
        out_p = pl.pallas_call(
            kernel,
            out_shape=jax.ShapeDtypeStruct((M, N), x.dtype),
            grid_spec=pltpu.PrefetchScalarGridSpec(
                num_scalar_prefetch=0,
                grid=grid,
                in_specs=[x_spec, w_spec, u_spec],
                out_specs=o_spec,
                scratch_shapes=scratch,
            ),
            compiler_params=cparams,
            cost_estimate=cost,
        )(x_p, w_p, u)
    else:
        kernel = functools.partial(_linear_relu_kernel, compute_dtype=compute_dtype)
        out_p = pl.pallas_call(
            kernel,
            out_shape=jax.ShapeDtypeStruct((M, N), x.dtype),
            grid_spec=pltpu.PrefetchScalarGridSpec(
                num_scalar_prefetch=0,
                grid=grid,
                in_specs=[x_spec, w_spec],
                out_specs=o_spec,
                scratch_shapes=scratch,
            ),
            compiler_params=cparams,
            cost_estimate=cost,
        )(x_p, w_p)

    if (M, N) != (batch, output_dim):
        out_p = out_p[:batch, :output_dim]
    return out_p


if __name__ == "__main__":
    key = jax.random.PRNGKey(0)
    k_x, k_w, k_d = jax.random.split(key, 3)

    batch, input_dim, output_dim = 64, 256, 256
    dropout_p = 0.2

    # nn.Linear-style init: uniform(-1/sqrt(in), 1/sqrt(in)), no bias.
    bound = 1.0 / (input_dim ** 0.5)
    weight = jax.random.uniform(k_w, (output_dim, input_dim),
                                minval=-bound, maxval=bound, dtype=jnp.float32)
    x = jax.random.normal(k_x, (batch, input_dim), dtype=jnp.float32)
    ref = jnp.maximum(x @ weight.T, 0.0)

    # Eval mode (Dropout == identity). Small tiles to exercise the 2x2x2 grid
    # and the K-accumulator path.
    out = linear_block(x, weight, p=dropout_p, training=False,
                       tm=32, tn=128, tk=128)
    out = jax.block_until_ready(out)
    assert out.shape == (batch, output_dim)
    assert jnp.allclose(out, ref, atol=1e-4, rtol=1e-4), "eval mismatch vs reference"

    # Non-tile-aligned shapes exercise the zero-padding path.
    x2 = jax.random.normal(k_x, (10, 100), dtype=jnp.float32)
    w2 = jax.random.uniform(k_w, (72, 100), minval=-0.1, maxval=0.1,
                            dtype=jnp.float32)
    out2 = jax.block_until_ready(linear_block(x2, w2, training=False))
    ref2 = jnp.maximum(x2 @ w2.T, 0.0)
    assert out2.shape == (10, 72)
    assert jnp.allclose(out2, ref2, atol=1e-4, rtol=1e-4), "padded-shape mismatch"

    # Training mode (inverted dropout). Kept elements must equal ref / (1-p).
    out_tr = jax.block_until_ready(
        linear_block(x, weight, p=dropout_p, training=True, rng_key=k_d,
                     tm=32, tn=128, tk=128))
    nz = out_tr != 0.0
    assert jnp.allclose(jnp.where(nz, out_tr, 0.0),
                        jnp.where(nz, ref / (1.0 - dropout_p), 0.0),
                        atol=1e-4, rtol=1e-4), "train-mode kept values mismatch"

    print("KERNEL_OK")
</pallas_src>

<mosaic_0001>
module attributes {stable_mosaic.version = 11 : i64} {
  func.func @_linear_relu_kernel(%arg0: i32, %arg1: i32, %arg2: i32, %arg3: memref<32x128xf32, #tpu.memory_space<vmem>>, %arg4: memref<128x128xf32, #tpu.memory_space<vmem>>, %arg5: memref<32x128xf32, #tpu.memory_space<vmem>>, %arg6: memref<32x128xf32, #tpu.memory_space<vmem>>) attributes {dimension_semantics = [#tpu.dimension_semantics<parallel>, #tpu.dimension_semantics<parallel>, #tpu.dimension_semantics<arbitrary>], iteration_bounds = array<i64: 2, 2, 2>, scalar_prefetch = 0 : i64, scratch_operands = 1 : i64, tpu.core_type = #tpu.core_type<tc>, window_params = [{transform_indices = @transform_0, window_bounds = array<i64: 32, 128>}, {transform_indices = @transform_1, window_bounds = array<i64: 128, 128>}, {transform_indices = @transform_2, window_bounds = array<i64: 32, 128>}]} {
    %c0_i32 = arith.constant 0 : i32
    %0 = arith.cmpi eq, %arg2, %c0_i32 : i32
    %1 = arith.extui %0 : i1 to i32
    %c0_i32_0 = arith.constant 0 : i32
    %2 = arith.cmpi ne, %1, %c0_i32_0 : i32
    scf.if %2 {
      %cst_9 = arith.constant 0.000000e+00 : f32
      %12 = vector.broadcast %cst_9 : f32 to vector<32x128xf32>
      %c0_10 = arith.constant 0 : index
      %c0_11 = arith.constant 0 : index
      %13 = vector.load %arg6[%c0_10, %c0_11] : memref<32x128xf32, #tpu.memory_space<vmem>>, vector<32x128xf32>
      tpu.vector_store %arg6[%c0_10, %c0_11], %12 {strides = array<i32>} : memref<32x128xf32, #tpu.memory_space<vmem>>, vector<32x128xf32>,
    } else {
    }
    %c0 = arith.constant 0 : index
    %c0_1 = arith.constant 0 : index
    %3 = vector.load %arg3[%c0, %c0_1] : memref<32x128xf32, #tpu.memory_space<vmem>>, vector<32x128xf32>
    %c0_2 = arith.constant 0 : index
    %c0_3 = arith.constant 0 : index
    %4 = vector.load %arg4[%c0_2, %c0_3] : memref<128x128xf32, #tpu.memory_space<vmem>>, vector<128x128xf32>
    %c0_4 = arith.constant 0 : index
    %c0_5 = arith.constant 0 : index
    %5 = vector.load %arg6[%c0_4, %c0_5] : memref<32x128xf32, #tpu.memory_space<vmem>>, vector<32x128xf32>
    %cst = arith.constant dense<0.000000e+00> : vector<32x128xf32>
    %6 = tpu.matmul %3, %4, %cst {dimension_numbers = #tpu.dot_dimension_numbers<[1], [1], [0], [0], [0, 0, 1, 0], [], []>} : vector<32x128xf32>, vector<128x128xf32>, vector<32x128xf32> -> vector<32x128xf32>
    %7 = arith.addf %5, %6 : vector<32x128xf32>
    %c0_6 = arith.constant 0 : index
    %c0_7 = arith.constant 0 : index
    %8 = vector.load %arg6[%c0_6, %c0_7] : memref<32x128xf32, #tpu.memory_space<vmem>>, vector<32x128xf32>
    tpu.vector_store %arg6[%c0_6, %c0_7], %7 {strides = array<i32>} : memref<32x128xf32, #tpu.memory_space<vmem>>, vector<32x128xf32>,
    %c1_i32 = arith.constant 1 : i32
    %9 = arith.cmpi eq, %arg2, %c1_i32 : i32
    %10 = arith.extui %9 : i1 to i32
    %c0_i32_8 = arith.constant 0 : i32
    %11 = arith.cmpi ne, %10, %c0_i32_8 : i32
    scf.if %11 {
      %c0_9 = arith.constant 0 : index
      %c0_10 = arith.constant 0 : index
      %12 = vector.load %arg6[%c0_9, %c0_10] : memref<32x128xf32, #tpu.memory_space<vmem>>, vector<32x128xf32>
      %cst_11 = arith.constant 0.000000e+00 : f32
      %13 = vector.broadcast %cst_11 : f32 to vector<32x128xf32>
      %14 = arith.maximumf %12, %13 : vector<32x128xf32>
      %c0_12 = arith.constant 0 : index
      %c0_13 = arith.constant 0 : index
      %15 = vector.load %arg5[%c0_12, %c0_13] : memref<32x128xf32, #tpu.memory_space<vmem>>, vector<32x128xf32>
      tpu.vector_store %arg5[%c0_12, %c0_13], %14 {strides = array<i32>} : memref<32x128xf32, #tpu.memory_space<vmem>>, vector<32x128xf32>,
    } else {
    }
    return
  }
  func.func @transform_0(%arg0: i32, %arg1: i32, %arg2: i32) -> (i32, i32) {
    %c0_i32 = arith.constant 0 : i32
    return %arg0, %arg2 : i32, i32
  }
  func.func @transform_1(%arg0: i32, %arg1: i32, %arg2: i32) -> (i32, i32) {
    %c0_i32 = arith.constant 0 : i32
    return %arg1, %arg2 : i32, i32
  }
  func.func @transform_2(%arg0: i32, %arg1: i32, %arg2: i32) -> (i32, i32) {
    %c0_i32 = arith.constant 0 : i32
    return %arg0, %arg1 : i32, i32
  }
}

</mosaic_0001>

<llo_original>
// kernel: tpu_custom_call.1
$region0: #{tpu_custom_call.1}
  #allocation0 [shape = 'u32[]', space=smem, size = 0x4, offset = 0x4, fixed_abs, tag = 'smem constant byte address 0x4 - core index']
  #allocation1 [shape = 'u32[72,128]{1,0:T(1,128)}', space=vmem, size = 0x9000, scoped, tag = 'internal scratch']
  #allocation2 [shape = 'f32[32,128]{1,0:T(8,128)}', space=vmem, size = 0x4000, scoped, tag = 'scratch operand']
  %s0 = inlined_call_operand.hbm [shape: f32[64,256], index: 0, kind: input, shape index: {}]
  %s1 = inlined_call_operand.hbm [shape: f32[256,256], index: 1, kind: input, shape index: {}]
  %s2 = inlined_call_operand.hbm [shape: f32[64,256], index: 2, kind: output, shape index: {}]
  %s3 = sld [smem:[#allocation0]]
  $region57: #{tpu_custom_call.1} parent=0
    _
  %s5 = ssub.s32 1, %s3
  %s6 = scalar_select 0, %s5, %s3
  $region1: #{tpu_custom_call.1} parent=0
    #allocation3 [shape = 'u8[32768]{0}', space=vmem, size = 0x8000, scoped, tag = 'input window, operand 0']
    #allocation4 [shape = 's32[2]{0}', space=sflag, size = 0x8, scoped, tag = 'scoped memory for tpu_custom_call.1']
    #allocation5 [shape = 's32[2]{0}', space=sflag, size = 0x8, scoped, tag = 'scoped memory for tpu_custom_call.1']
    #allocation6 [shape = 'u8[131072]{0}', space=vmem, size = 0x20000, scoped, tag = 'input window, operand 1']
    #allocation7 [shape = 's32[2]{0}', space=sflag, size = 0x8, scoped, tag = 'scoped memory for tpu_custom_call.1']
    #allocation8 [shape = 'u8[32768]{0}', space=vmem, size = 0x8000, scoped, tag = 'output window, operand 0']
    %7 = vsyncpa [#allocation4], 0
    %s8 = scalar_lea.sflag [#allocation4], 1
    %9 = vsyncpa %s8, 0
    %10 = vsyncpa [#allocation7], 0
    %s11 = scalar_lea.sflag [#allocation7], 1
    %12 = vsyncpa %s11, 0
    %13 = vsyncpa [#allocation5], 0
    %s14 = scalar_lea.sflag [#allocation5], 1
    %15 = vsyncpa %s14, 0
    loop: start=0, step=1, limit=10
    $region2: #{tpu_custom_call.1} parent=1 // loop_pre_header
      _
    $region3: #{tpu_custom_call.1} parent=1 // loop_header
      %s17 = sphi 0, %s21
      %p18 = scmp.ge.s32.totalorder %s17, 10
      %s24 = sphi 0, %s43
      %s25 = sphi 0, %s39
      %s26 = sphi 0, %s35
      %s27 = sphi 0, %s24
      %s28 = sphi 0, %s25
      %s29 = sphi 0, %s26
      %s30 = sphi 0, %s27
      %s31 = sphi 0, %s28
      %s32 = sphi 0, %s29
      %s48 = sphi 0, %s50
      %s51 = sphi 0, %s48
      %s52 = sphi 0, %s51
      %s68 = sphi 0, %s52
      %s76 = sphi 0, %s78
      %s79 = sphi 0, %s76
      %s80 = sphi 0, %s79
      %s96 = sphi 0, %s80
      %s104 = sphi 0, %s106
      %s107 = sphi 0, %s104
      %s108 = sphi 0, %s107
      %s124 = sphi 0, %s108
    $region4: #{tpu_custom_call.1} parent=1 // loop_header_branch
      %20 = sbr.rel (%p18) target = $region8
    $region5: #{tpu_custom_call.1} parent=1 // loop_body
      %s22 = ssub.s32 %s17, 1
      %s23 = ssub.s32 %s17, 2
      %s33 = sadd.s32 1, %s26
      %p34 = scmp.ge.s32.totalorder %s33, 2
      %s35 = scalar_select %p34, 0, %s33
      %s36 = sadd.s32 1, %s25
      %s37 = scalar_select %p34, %s36, %s25
      %p38 = scmp.ge.s32.totalorder %s37, 2
      %s39 = scalar_select %p38, 0, %s37
      %s40 = sadd.s32 1, %s24
      %s41 = scalar_select %p38, %s40, %s24
      %p42 = scmp.ge.s32.totalorder %s41, 2
      %s43 = scalar_select %p42, 0, %s41
      %s44 = ssub.s32 %s24, %s43
      %s45 = ssub.s32 %s26, %s35
      %s46 = sor.u32 %s44, %s45
      %p47 = scmp.eq.s32.totalorder %s46, 0
      %s49 = sadd.s32 %s48, 1
      %s50 = scalar_select %p47, %s48, %s49
      %p53 = pneg %p47
      %p54 = scmp.eq.s32.totalorder %s17, 7
      %p55 = por %p53, %p54
      %p56 = scmp.ne.s32.totalorder %s48, %s51
      %p57 = scmp.eq.s32.totalorder %s17, 0
      %p58 = por %p56, %p57
      %p59 = scmp.ne.s32.totalorder %s48, %s51
      %p60 = scmp.eq.s32.totalorder %s22, 7
      %p61 = por %p59, %p60
      %p62 = scmp.ne.s32.totalorder %s51, %s52
      %p63 = scmp.eq.s32.totalorder %s22, 0
      %p64 = por %p62, %p63
      %p65 = scmp.ne.s32.totalorder %s51, %s52
      %p66 = scmp.eq.s32.totalorder %s23, 7
      %p67 = por %p65, %p66
      %p69 = scmp.ne.s32.totalorder %s52, %s68
      %p70 = scmp.eq.s32.totalorder %s23, 0
      %p71 = por %p69, %p70
      %s72 = ssub.s32 %s25, %s39
      %s73 = ssub.s32 %s26, %s35
      %s74 = sor.u32 %s72, %s73
      %p75 = scmp.eq.s32.totalorder %s74, 0
      %s77 = sadd.s32 %s76, 1
      %s78 = scalar_select %p75, %s76, %s77
      %p81 = pneg %p75
      %p82 = scmp.eq.s32.totalorder %s17, 7
      %p83 = por %p81, %p82
      %p84 = scmp.ne.s32.totalorder %s76, %s79
      %p85 = scmp.eq.s32.totalorder %s17, 0
      %p86 = por %p84, %p85
      %p87 = scmp.ne.s32.totalorder %s76, %s79
      %p88 = scmp.eq.s32.totalorder %s22, 7
      %p89 = por %p87, %p88
      %p90 = scmp.ne.s32.totalorder %s79, %s80
      %p91 = scmp.eq.s32.totalorder %s22, 0
      %p92 = por %p90, %p91
      %p93 = scmp.ne.s32.totalorder %s79, %s80
      %p94 = scmp.eq.s32.totalorder %s23, 7
      %p95 = por %p93, %p94
      %p97 = scmp.ne.s32.totalorder %s80, %s96
      %p98 = scmp.eq.s32.totalorder %s23, 0
      %p99 = por %p97, %p98
      %s100 = ssub.s32 %s24, %s43
      %s101 = ssub.s32 %s25, %s39
      %s102 = sor.u32 %s100, %s101
      %p103 = scmp.eq.s32.totalorder %s102, 0
      %s105 = sadd.s32 %s104, 1
      %s106 = scalar_select %p103, %s104, %s105
      %p109 = pneg %p103
      %p110 = scmp.eq.s32.totalorder %s17, 7
      %p111 = por %p109, %p110
      %p112 = scmp.ne.s32.totalorder %s104, %s107
      %p113 = scmp.eq.s32.totalorder %s17, 0
      %p114 = por %p112, %p113
      %p115 = scmp.ne.s32.totalorder %s104, %s107
      %p116 = scmp.eq.s32.totalorder %s22, 7
      %p117 = por %p115, %p116
      %p118 = scmp.ne.s32.totalorder %s107, %s108
      %p119 = scmp.eq.s32.totalorder %s22, 0
      %p120 = por %p118, %p119
      %p121 = scmp.ne.s32.totalorder %s107, %s108
      %p122 = scmp.eq.s32.totalorder %s23, 7
      %p123 = por %p121, %p122
      %p125 = scmp.ne.s32.totalorder %s108, %s124
      %p126 = scmp.eq.s32.totalorder %s23, 0
      %p127 = por %p125, %p126
      %p128 = scmp.le.s32.totalorder 1, %s17
      %p129 = scmp.lt.s32.totalorder %s17, 9
      %p130 = pnand %p128, %p129
      %p131 = pneg %p130
      // Predicated region
      $region9: #{tpu_custom_call.1} parent=5 // pred_check
        _
      $region10: #{tpu_custom_call.1} parent=5 // pred_check_branch
        %133 = sbr.rel (%p130) target = $region12
      $region11: #{tpu_custom_call.1} parent=5 // pred_region
        %s134 = ssub.s32 %s17, 1
      $region12: #{tpu_custom_call.1} parent=5 // pred_fallthru
        _
      %p135 = scmp.lt.s32.totalorder %s17, 8
      // Predicated region
      $region13: #{tpu_custom_call.1} parent=5 // pred_check
        %p136 = pneg %p135
      $region14: #{tpu_custom_call.1} parent=5 // pred_check_branch
        %138 = sbr.rel (%p136) target = $region16
      $region15: #{tpu_custom_call.1} parent=5 // pred_region
        // Predicated region
        $region17: #{tpu_custom_call.1} parent=15 // pred_check
          %p139 = pneg %p58
        $region18: #{tpu_custom_call.1} parent=15 // pred_check_branch
          %141 = sbr.rel (%p139) target = $region20
        $region19: #{tpu_custom_call.1} parent=15 // pred_region
          %s142 = sand.u32 %s48, 1
          %s143 = scalar_lea.sflag [#allocation4], %s142
          %s144 = sand.u32 %s48, 1
          %s145 = smul.addr %s144, 32
          %s146 = scalar_lea.vmem [#allocation3], %s145
          %s147 = smul.u32 4, %s24
          %149 = vsyncadd %s143, 0
          %s150 = smul.addr %s147, 2
          %s151 = sadd.s32 %s26, %s150
          %s152 = smul.addr %s151, 8
          %s153 = scalar_lea.hbm %s0, %s152
          %s154 = sshll.u32 %s153, 4
          %s155 = int_to_ptr.hbm [resolvable:$true] %s154
          %s156 = sshll.u32 %s146, 4
          %s157 = int_to_ptr.vmem [resolvable:$true] %s156
          %162 = dma.hbm_to_vmem [thread:$0]  %s155, 512, %s157, %s143, 256, 128, 8
        $region20: #{tpu_custom_call.1} parent=15 // pred_fallthru
          _
        // Predicated region
        $region21: #{tpu_custom_call.1} parent=15 // pred_check
          %p163 = pneg %p86
        $region22: #{tpu_custom_call.1} parent=15 // pred_check_branch
          %165 = sbr.rel (%p163) target = $region24
        $region23: #{tpu_custom_call.1} parent=15 // pred_region
          %s166 = sand.u32 %s76, 1
          %s167 = scalar_lea.sflag [#allocation7], %s166
          %s168 = sand.u32 %s76, 1
          %s169 = smul.addr %s168, 128
          %s170 = scalar_lea.vmem [#allocation6], %s169
          %s171 = smul.u32 16, %s25
          %173 = vsyncadd %s167, 0
          %s174 = smul.addr %s171, 2
          %s175 = sadd.s32 %s26, %s174
          %s176 = smul.addr %s175, 8
          %s177 = scalar_lea.hbm %s1, %s176
          %s178 = sshll.u32 %s177, 4
          %s179 = int_to_ptr.hbm [resolvable:$true] %s178
          %s180 = sshll.u32 %s170, 4
          %s181 = int_to_ptr.vmem [resolvable:$true] %s180
          %186 = dma.hbm_to_vmem [thread:$0]  %s179, 2048, %s181, %s167, 256, 128, 8
        $region24: #{tpu_custom_call.1} parent=15 // pred_fallthru
          _
      $region16: #{tpu_custom_call.1} parent=5 // pred_fallthru
        _
      %p187 = scmp.le.s32.totalorder 1, %s17
      %p188 = scmp.lt.s32.totalorder %s17, 9
      %p189 = pnand %p187, %p188
      %p190 = pneg %p189
      // Predicated region
      $region25: #{tpu_custom_call.1} parent=5 // pred_check
        _
      $region26: #{tpu_custom_call.1} parent=5 // pred_check_branch
        %192 = sbr.rel (%p189) target = $region28
      $region27: #{tpu_custom_call.1} parent=5 // pred_region
        %s193 = ssub.s32 %s17, 1
        %s194 = sand.u32 %s51, 1
        %s195 = scalar_lea.sflag [#allocation4], %s194
        %s196 = sand.u32 %s51, 1
        %s197 = smul.addr %s196, 32
        %s198 = scalar_lea.vmem [#allocation3], %s197
        // Predicated region
        $region29: #{tpu_custom_call.1} parent=27 // pred_check
          %p199 = pneg %p64
        $region30: #{tpu_custom_call.1} parent=27 // pred_check_branch
          %201 = sbr.rel (%p199) target = $region32
        $region31: #{tpu_custom_call.1} parent=27 // pred_region
          %203 = dma.done %s195, 512
        $region32: #{tpu_custom_call.1} parent=27 // pred_fallthru
          _
        %s204 = sand.u32 %s79, 1
        %s205 = scalar_lea.sflag [#allocation7], %s204
        %s206 = sand.u32 %s79, 1
        %s207 = smul.addr %s206, 128
        %s208 = scalar_lea.vmem [#allocation6], %s207
        // Predicated region
        $region33: #{tpu_custom_call.1} parent=27 // pred_check
          %p209 = pneg %p92
        $region34: #{tpu_custom_call.1} parent=27 // pred_check_branch
          %211 = sbr.rel (%p209) target = $region36
        $region35: #{tpu_custom_call.1} parent=27 // pred_region
          %213 = dma.done %s205, 2048
        $region36: #{tpu_custom_call.1} parent=27 // pred_fallthru
          _
        %s214 = sand.u32 %s51, 1
        %s215 = scalar_lea.sflag [#allocation4], %s214
        %s216 = sand.u32 %s51, 1
        %s217 = smul.addr %s216, 32
        %s218 = scalar_lea.vmem [#allocation3], %s217
        %p219 = pneg %p64
        %p220 = pneg %p61
        %s221 = sand.u32 %s79, 1
        %s222 = scalar_lea.sflag [#allocation7], %s221
        %s223 = sand.u32 %s79, 1
        %s224 = smul.addr %s223, 128
        %s225 = scalar_lea.vmem [#allocation6], %s224
        %p226 = pneg %p92
        %p227 = pneg %p89
        %p228 = pneg %p120
        %p229 = pneg %p117
        %s230 = sand.u32 %s107, 1
        %s231 = scalar_lea.sflag [#allocation5], %s230
        %s232 = sand.u32 %s107, 1
        %s233 = smul.addr %s232, 32
        %s234 = scalar_lea.vmem [#allocation8], %s233
        %s235 = smul.u32 4, %s27
        %s236 = smul.u32 16, %s28
        %s237 = smul.u32 4, %s27
        %p238 = scmp.eq.s32.totalorder %s29, 0
        // Predicated region
        $region37: #{tpu_custom_call.1} parent=27 // pred_check
          %p239 = pneg %p238
        $region38: #{tpu_custom_call.1} parent=27 // pred_check_branch
          %241 = sbr.rel (%p239) target = $region40
        $region39: #{tpu_custom_call.1} parent=27 // pred_region
          %242 = vst [vmem:[#allocation2] sm:$0xff] 0.0
          %243 = vst [vmem:[#allocation2 + $0x8] sm:$0xff] 0.0
          %244 = vst [vmem:[#allocation2 + $0x10] sm:$0xff] 0.0
          %245 = vst [vmem:[#allocation2 + $0x18] sm:$0xff] 0.0
        $region40: #{tpu_custom_call.1} parent=27 // pred_fallthru
          _
        %v246 = vld [vmem:[%s198] sm:$0xff]
        %v247 = vld [vmem:[%s198 + $0x8] sm:$0xff]
        %v248 = vld [vmem:[%s198 + $0x10] sm:$0xff]
        %v249 = vld [vmem:[%s198 + $0x18] sm:$0xff]
        %v250 = vld [vmem:[%s208] sm:$0xff]
        %v251 = vld [vmem:[%s208 + $0x8] sm:$0xff]
        %v252 = vld [vmem:[%s208 + $0x10] sm:$0xff]
        %v253 = vld [vmem:[%s208 + $0x18] sm:$0xff]
        %v254 = vld [vmem:[%s208 + $0x20] sm:$0xff]
        %v255 = vld [vmem:[%s208 + $0x28] sm:$0xff]
        %v256 = vld [vmem:[%s208 + $0x30] sm:$0xff]
        %v257 = vld [vmem:[%s208 + $0x38] sm:$0xff]
        %v258 = vld [vmem:[%s208 + $0x40] sm:$0xff]
        %v259 = vld [vmem:[%s208 + $0x48] sm:$0xff]
        %v260 = vld [vmem:[%s208 + $0x50] sm:$0xff]
        %v261 = vld [vmem:[%s208 + $0x58] sm:$0xff]
        %v262 = vld [vmem:[%s208 + $0x60] sm:$0xff]
        %v263 = vld [vmem:[%s208 + $0x68] sm:$0xff]
        %v264 = vld [vmem:[%s208 + $0x70] sm:$0xff]
        %v265 = vld [vmem:[%s208 + $0x78] sm:$0xff]
        %v266 = vld [vmem:[#allocation2] sm:$0xff]
        %v267 = vld [vmem:[#allocation2 + $0x8] sm:$0xff]
        %v268 = vld [vmem:[#allocation2 + $0x10] sm:$0xff]
        %v269 = vld [vmem:[#allocation2 + $0x18] sm:$0xff]
        %270 = vmatpush.xpose.msra.mxu0 %v265
        %271 = vmatpush.xpose.msra.mxu0 %v264
        %272 = vmatpush.xpose.msra.mxu0 %v263
        %273 = vmatpush.xpose.msra.mxu0 %v262
        %274 = vmatpush.xpose.msra.mxu0 %v261
        %275 = vmatpush.xpose.msra.mxu0 %v260
        %276 = vmatpush.xpose.msra.mxu0 %v259
        %277 = vmatpush.xpose.msra.mxu0 %v258
        %278 = vmatpush.xpose.msra.mxu0 %v257
        %279 = vmatpush.xpose.msra.mxu0 %v256
        %280 = vmatpush.xpose.msra.mxu0 %v255
        %281 = vmatpush.xpose.msra.mxu0 %v254
        %282 = vmatpush.xpose.msra.mxu0 %v253
        %283 = vmatpush.xpose.msra.mxu0 %v252
        %284 = vmatpush.xpose.msra.mxu0 %v251
        %285 = vmatpush.xpose.msra.mxu0 %v250
        %286 = vmatmul.f32.gmra.mxu0 %v246
        %v287 = vpop.f32.mrf.mxu0
        %v288 = vadd.f32 0.0, %v287
        %289 = vmatmul.f32.gmra.mxu0 %v247
        %v290 = vpop.f32.mrf.mxu0
        %v291 = vadd.f32 0.0, %v290
        %292 = vmatmul.f32.gmra.mxu0 %v248
        %v293 = vpop.f32.mrf.mxu0
        %v294 = vadd.f32 0.0, %v293
        %295 = vmatmul.f32.gmra.mxu0 %v249
        %v296 = vpop.f32.mrf.mxu0
        %v297 = vadd.f32 0.0, %v296
        %298 = vdwg.mxu0
        %v299 = vadd.f32 %v266, %v288
        %v300 = vadd.f32 %v267, %v291
        %v301 = vadd.f32 %v268, %v294
        %v302 = vadd.f32 %v269, %v297
        %303 = vst [vmem:[#allocation2] sm:$0xff] %v299
        %304 = vst [vmem:[#allocation2 + $0x8] sm:$0xff] %v300
        %305 = vst [vmem:[#allocation2 + $0x10] sm:$0xff] %v301
        %306 = vst [vmem:[#allocation2 + $0x18] sm:$0xff] %v302
        %p307 = scmp.eq.s32.totalorder %s29, 1
        // Predicated region
        $region41: #{tpu_custom_call.1} parent=27 // pred_check
          %p308 = pneg %p307
        $region42: #{tpu_custom_call.1} parent=27 // pred_check_branch
          %310 = sbr.rel (%p308) target = $region44
        $region43: #{tpu_custom_call.1} parent=27 // pred_region
          %v311 = vld [vmem:[#allocation2] sm:$0xff]
          %v312 = vld [vmem:[#allocation2 + $0x8] sm:$0xff]
          %v313 = vld [vmem:[#allocation2 + $0x10] sm:$0xff]
          %v314 = vld [vmem:[#allocation2 + $0x18] sm:$0xff]
          %v315 = vmax.f32 %v311, 0.0
          %v316 = vmax.f32 %v312, 0.0
          %v317 = vmax.f32 %v313, 0.0
          %v318 = vmax.f32 %v314, 0.0
          %319 = vst [vmem:[%s234] sm:$0xff] %v315
          %320 = vst [vmem:[%s234 + $0x8] sm:$0xff] %v316
          %321 = vst [vmem:[%s234 + $0x10] sm:$0xff] %v317
          %322 = vst [vmem:[%s234 + $0x18] sm:$0xff] %v318
        $region44: #{tpu_custom_call.1} parent=27 // pred_fallthru
          _
        %s323 = sand.u32 %s107, 1
        %s324 = scalar_lea.sflag [#allocation5], %s323
        %s325 = sand.u32 %s107, 1
        %s326 = smul.addr %s325, 32
        %s327 = scalar_lea.vmem [#allocation8], %s326
        // Predicated region
        $region45: #{tpu_custom_call.1} parent=27 // pred_check
          %p328 = pneg %p117
        $region46: #{tpu_custom_call.1} parent=27 // pred_check_branch
          %330 = sbr.rel (%p328) target = $region48
        $region47: #{tpu_custom_call.1} parent=27 // pred_region
          %s331 = smul.u32 4, %s27
          %333 = vsyncadd %s324, 0
          %s334 = smul.addr %s331, 2
          %s335 = sadd.s32 %s28, %s334
          %s336 = smul.addr %s335, 8
          %s337 = scalar_lea.hbm %s2, %s336
          %s338 = sshll.u32 %s327, 4
          %s339 = int_to_ptr.vmem [resolvable:$true] %s338
          %s340 = sshll.u32 %s337, 4
          %s341 = int_to_ptr.hbm [resolvable:$true] %s340
          %346 = dma.vmem_to_hbm [thread:$0]  %s339, 512, %s341, %s324, 128, 256, 8
        $region48: #{tpu_custom_call.1} parent=27 // pred_fallthru
          _
      $region28: #{tpu_custom_call.1} parent=5 // pred_fallthru
        _
      %p347 = scmp.le.s32.totalorder 2, %s17
      // Predicated region
      $region49: #{tpu_custom_call.1} parent=5 // pred_check
        %p348 = pneg %p347
      $region50: #{tpu_custom_call.1} parent=5 // pred_check_branch
        %350 = sbr.rel (%p348) target = $region52
      $region51: #{tpu_custom_call.1} parent=5 // pred_region
        %s351 = ssub.s32 %s17, 2
        // Predicated region
        $region53: #{tpu_custom_call.1} parent=51 // pred_check
          %p352 = pneg %p123
        $region54: #{tpu_custom_call.1} parent=51 // pred_check_branch
          %354 = sbr.rel (%p352) target = $region56
        $region55: #{tpu_custom_call.1} parent=51 // pred_region
          %s355 = sand.u32 %s108, 1
          %s356 = scalar_lea.sflag [#allocation5], %s355
          %s357 = sand.u32 %s108, 1
          %s358 = smul.addr %s357, 32
          %s359 = scalar_lea.vmem [#allocation8], %s358
          %361 = dma.done %s356, 512
        $region56: #{tpu_custom_call.1} parent=51 // pred_fallthru
          _
      $region52: #{tpu_custom_call.1} parent=5 // pred_fallthru
        _
    $region6: #{tpu_custom_call.1} parent=1 // loop_footer
      %s21 = sadd.s32 1, %s17
    $region7: #{tpu_custom_call.1} parent=1 // loop_footer_branch
      %16 = sbr.rel target = $region3
    $region8: #{tpu_custom_call.1} parent=1 // loop_exit
      _
    %362 = vsyncpa [#allocation4], 1
    %s363 = scalar_lea.sflag [#allocation4], 1
    %364 = vsyncpa %s363, 1
    %365 = vsyncpa [#allocation7], 1
    %s366 = scalar_lea.sflag [#allocation7], 1
    %367 = vsyncpa %s366, 1
    %368 = vsyncpa [#allocation5], 1
    %s369 = scalar_lea.sflag [#allocation5], 1
    %370 = vsyncpa %s369, 1

</llo_original>
